<compile_context>
chip_gen: v7x
topology: tpu7x:2x2x1
jax: 0.10.0
libtpu: 0.0.40
codegen_flags: <defaults>
</compile_context>

<pallas_src>
import functools

import jax
import jax.numpy as jnp
from jax.experimental import pallas as pl
from jax.experimental.pallas import tpu as pltpu


def _pyconv_fused_kernel(x_ref, w_ref, o_ref, *, tap_shifts):
    """One grid step of the fused pyramid convolution.

    x_ref: (1, Cin, Lfold)     zero-padded, flattened spatial plane(s);
                               Lfold = batch_block * Lpad (batch folded into
                               the lane axis)
    w_ref: (Cout, KH*KW*Cin)   fused/embedded weight matrix (constant block)
    o_ref: (1, Cout, Lfold)    lane-dense output (flattened plane(s))
    """
    x = x_ref[0]                              # (Cin, Lfold)
    lfold = x.shape[-1]

    # im2col via XLU lane rotations (static unroll over the KH*KW taps).
    # rolled[c, i] == x[c, i + d]; for every output lane we keep, i + d stays
    # inside the same batch slot (l + d <= L - 1 < Lpad), so no wraparound or
    # cross-sample reads.
    taps = [x if d == 0 else pltpu.roll(x, shift=lfold - d, axis=1)
            for d in tap_shifts]
    patches = jnp.concatenate(taps, axis=0)   # (KH*KW*Cin, Lfold)

    # Single MXU matmul per grid step, f32 accumulation.
    o_ref[0] = jnp.dot(w_ref[...], patches,
                       preferred_element_type=jnp.float32).astype(o_ref.dtype)


def _embed_grouped_weight(w, groups, cin_total, k_max):
    """Embed a grouped-conv weight (Cout, Cin/groups, k, k) into a dense
    (Cout, Cin_total, k_max, k_max) weight: block-diagonal over groups in the
    input-channel dim, kernel taps center-padded from k to k_max."""
    cout, cin_g, k, _ = w.shape
    cout_g = cout // groups
    w_dense = jnp.zeros((cout, cin_total, k, k), w.dtype)
    for g in range(groups):
        w_dense = w_dense.at[g * cout_g:(g + 1) * cout_g,
                             g * cin_g:(g + 1) * cin_g].set(
                                 w[g * cout_g:(g + 1) * cout_g])
    pad = (k_max - k) // 2
    return jnp.pad(w_dense, ((0, 0), (0, 0), (pad, pad), (pad, pad)))


def _pick_batch_block(n, cin, lpad, n_taps):
    """How many batch samples to fold into the lane axis of one grid step.

    Fold only when the per-sample plane is narrow (so the matmul free dim is
    otherwise under ~1K lanes and the fixed per-step overhead dominates), and
    cap the in-kernel patch matrix at ~4 MiB so VMEM stays comfortable even on
    v7x (64 MiB/TC)."""
    target_lanes = 1024
    nb = max(1, target_lanes // lpad)
    patch_bytes = n_taps * cin * lpad * 4
    while nb > 1 and nb * patch_bytes > 4 * 1024 * 1024:
        nb //= 2
    return max(1, min(n, nb))


def pyconv2_forward(x_nchw, w1, w2, *, pyconv_groups=(1, 4), compute_dtype=None,
                    batch_block=None):
    """PyConv2.forward: concat(conv3x3_g1(x), conv5x5_g4(x)) along channels.

    x_nchw: (N, Cin, H, W)
    w1:     (planes//2, Cin, 3, 3)              groups=pyconv_groups[0], pad=1
    w2:     (planes//2, Cin//groups[1], 5, 5)   groups=pyconv_groups[1], pad=2
    returns (N, planes, H, W)   (NCHW, channel order = [branch1, branch2])
    """
    N, Cin, H, W = x_nchw.shape
    ws = (w1, w2)
    kernels = tuple(int(w.shape[-1]) for w in ws)
    k_max = max(kernels)
    assert all((k_max - k) % 2 == 0 for k in kernels)

    # ---- fuse both branches (and their groups) into one dense weight matrix --
    w_all = jnp.concatenate(
        [_embed_grouped_weight(w, g, Cin, k_max)
         for w, g in zip(ws, pyconv_groups)], axis=0)          # (Cout, Cin, K, K)
    cout = w_all.shape[0]
    # Row/column order must match the in-kernel patch build: tap-major,
    # channel-minor.
    w_mat = w_all.transpose(0, 2, 3, 1).reshape(cout, k_max * k_max * Cin)

    # ---- pad + flatten the input once (max padding covers both branches) -----
    p = k_max // 2
    Hp, Wp = H + 2 * p, W + 2 * p
    L = Hp * Wp
    Lpad = ((L + 127) // 128) * 128            # lane-dense flattened length
    x_pad = jnp.pad(x_nchw, ((0, 0), (0, 0), (p, p), (p, p)))
    x_flat = jnp.pad(x_pad.reshape(N, Cin, L), ((0, 0), (0, 0), (0, Lpad - L)))

    # ---- fold batch_block samples into the lane axis of each grid step -------
    n_taps = k_max * k_max
    NB = batch_block if batch_block is not None else _pick_batch_block(
        N, Cin, Lpad, n_taps)
    n_steps = (N + NB - 1) // NB
    N_padded = n_steps * NB
    if N_padded != N:
        x_flat = jnp.pad(x_flat, ((0, N_padded - N), (0, 0), (0, 0)))
    Lfold = NB * Lpad
    x_fold = (x_flat.reshape(n_steps, NB, Cin, Lpad)
              .transpose(0, 2, 1, 3).reshape(n_steps, Cin, Lfold))

    if compute_dtype is not None:              # e.g. jnp.bfloat16 on v6e/v7x
        x_fold = x_fold.astype(compute_dtype)
        w_mat = w_mat.astype(compute_dtype)

    tap_shifts = tuple(kh * Wp + kw
                       for kh in range(k_max) for kw in range(k_max))
    kernel = functools.partial(_pyconv_fused_kernel, tap_shifts=tap_shifts)

    flops = 2 * N * cout * n_taps * Cin * H * W
    bytes_accessed = (x_fold.size * x_fold.dtype.itemsize
                      + w_mat.size * w_mat.dtype.itemsize
                      + n_steps * cout * Lfold * x_nchw.dtype.itemsize)

    out_fold = pl.pallas_call(
        kernel,
        out_shape=jax.ShapeDtypeStruct((n_steps, cout, Lfold), x_nchw.dtype),
        grid_spec=pltpu.PrefetchScalarGridSpec(
            num_scalar_prefetch=0,
            grid=(n_steps,),
            in_specs=[
                pl.BlockSpec((1, Cin, Lfold), lambda n: (n, 0, 0)),
                # constant block index -> weights DMA'd once, never re-fetched
                pl.BlockSpec((cout, n_taps * Cin), lambda n: (0, 0)),
            ],
            out_specs=pl.BlockSpec((1, cout, Lfold), lambda n: (n, 0, 0)),
        ),
        compiler_params=pltpu.CompilerParams(
            dimension_semantics=("parallel",),     # shard steps over TCs (v7x)
            vmem_limit_bytes=32 * 1024 * 1024),
        cost_estimate=pl.CostEstimate(flops=flops, transcendentals=0,
                                      bytes_accessed=bytes_accessed),
    )(x_fold, w_mat)

    # ---- unfold / un-pad back to NCHW (cheap slices of a small tensor) -------
    out_flat = (out_fold.reshape(n_steps, cout, NB, Lpad)
                .transpose(0, 2, 1, 3).reshape(N_padded, cout, Lpad)[:N])
    out = out_flat[:, :, :L].reshape(N, cout, Hp, Wp)[:, :, :H, :W]
    return out


def _reference_pyconv2(x_nchw, w1, w2, groups=(1, 4)):
    def ref_conv(x, w, g, pad):
        return jax.lax.conv_general_dilated(
            x, w, window_strides=(1, 1), padding=[(pad, pad), (pad, pad)],
            dimension_numbers=("NCHW", "OIHW", "NCHW"),
            feature_group_count=g)
    y1 = ref_conv(x_nchw, w1, groups[0], w1.shape[-1] // 2)
    y2 = ref_conv(x_nchw, w2, groups[1], w2.shape[-1] // 2)
    return jnp.concatenate([y1, y2], axis=1)


if __name__ == "__main__":
    # PyConv2(inplans=8, planes=8, pyconv_kernels=[3,5], stride=1,
    #         pyconv_groups=[1,4])
    N, Cin, H, W = 2, 8, 16, 16
    planes = 8
    groups = (1, 4)

    key = jax.random.PRNGKey(0)
    kx, k1, k2 = jax.random.split(key, 3)
    x = jax.random.normal(kx, (N, Cin, H, W), dtype=jnp.float32)
    # conv2_1: Conv2d(Cin, planes//2, k=3, pad=1, groups=1, bias=False)
    w1 = jax.random.normal(k1, (planes // 2, Cin, 3, 3), dtype=jnp.float32) * 0.1
    # conv2_2: Conv2d(Cin, planes//2, k=5, pad=2, groups=4, bias=False)
    w2 = jax.random.normal(k2, (planes // 2, Cin // groups[1], 5, 5),
                           dtype=jnp.float32) * 0.1

    out = pyconv2_forward(x, w1, w2, pyconv_groups=groups)
    out = jax.block_until_ready(out)

    ref = _reference_pyconv2(x, w1, w2, groups)
    assert out.shape == (N, planes, H, W), out.shape
    assert jnp.allclose(out, ref, atol=1e-4, rtol=1e-4), "mismatch vs lax reference"

    print("KERNEL_OK")
</pallas_src>

<mosaic_0001>
module attributes {stable_mosaic.version = 11 : i64} {
  func.func @_pyconv_fused_kernel(%arg0: i32, %arg1: memref<1x8x1024xf32, #tpu.memory_space<vmem>>, %arg2: memref<8x200xf32, #tpu.memory_space<vmem>>, %arg3: memref<1x8x1024xf32, #tpu.memory_space<vmem>>) attributes {dimension_semantics = [#tpu.dimension_semantics<parallel>], iteration_bounds = array<i64: 1>, scalar_prefetch = 0 : i64, scratch_operands = 0 : i64, tpu.core_type = #tpu.core_type<tc>, window_params = [{transform_indices = @transform_0, window_bounds = array<i64: 1, 8, 1024>}, {pipeline_mode = #tpu.pipeline_mode<synchronous>, transform_indices = @transform_1, window_bounds = array<i64: 8, 200>}, {transform_indices = @transform_2, window_bounds = array<i64: 1, 8, 1024>}]} {
    %c0 = arith.constant 0 : index
    %c0_0 = arith.constant 0 : index
    %c0_1 = arith.constant 0 : index
    %0 = vector.load %arg1[%c0, %c0_0, %c0_1] : memref<1x8x1024xf32, #tpu.memory_space<vmem>>, vector<1x8x1024xf32>
    %1 = vector.shape_cast %0 : vector<1x8x1024xf32> to vector<8x1024xf32>
    %c1023_i32 = arith.constant 1023 : i32
    %2 = tpu.dynamic_rotate %1 by %c1023_i32 dim 1 : vector<8x1024xf32>, i32 -> vector<8x1024xf32>
    %c1022_i32 = arith.constant 1022 : i32
    %3 = tpu.dynamic_rotate %1 by %c1022_i32 dim 1 : vector<8x1024xf32>, i32 -> vector<8x1024xf32>
    %c1021_i32 = arith.constant 1021 : i32
    %4 = tpu.dynamic_rotate %1 by %c1021_i32 dim 1 : vector<8x1024xf32>, i32 -> vector<8x1024xf32>
    %c1020_i32 = arith.constant 1020 : i32
    %5 = tpu.dynamic_rotate %1 by %c1020_i32 dim 1 : vector<8x1024xf32>, i32 -> vector<8x1024xf32>
    %c1004_i32 = arith.constant 1004 : i32
    %6 = tpu.dynamic_rotate %1 by %c1004_i32 dim 1 : vector<8x1024xf32>, i32 -> vector<8x1024xf32>
    %c1003_i32 = arith.constant 1003 : i32
    %7 = tpu.dynamic_rotate %1 by %c1003_i32 dim 1 : vector<8x1024xf32>, i32 -> vector<8x1024xf32>
    %c1002_i32 = arith.constant 1002 : i32
    %8 = tpu.dynamic_rotate %1 by %c1002_i32 dim 1 : vector<8x1024xf32>, i32 -> vector<8x1024xf32>
    %c1001_i32 = arith.constant 1001 : i32
    %9 = tpu.dynamic_rotate %1 by %c1001_i32 dim 1 : vector<8x1024xf32>, i32 -> vector<8x1024xf32>
    %c1000_i32 = arith.constant 1000 : i32
    %10 = tpu.dynamic_rotate %1 by %c1000_i32 dim 1 : vector<8x1024xf32>, i32 -> vector<8x1024xf32>
    %c984_i32 = arith.constant 984 : i32
    %11 = tpu.dynamic_rotate %1 by %c984_i32 dim 1 : vector<8x1024xf32>, i32 -> vector<8x1024xf32>
    %c983_i32 = arith.constant 983 : i32
    %12 = tpu.dynamic_rotate %1 by %c983_i32 dim 1 : vector<8x1024xf32>, i32 -> vector<8x1024xf32>
    %c982_i32 = arith.constant 982 : i32
    %13 = tpu.dynamic_rotate %1 by %c982_i32 dim 1 : vector<8x1024xf32>, i32 -> vector<8x1024xf32>
    %c981_i32 = arith.constant 981 : i32
    %14 = tpu.dynamic_rotate %1 by %c981_i32 dim 1 : vector<8x1024xf32>, i32 -> vector<8x1024xf32>
    %c980_i32 = arith.constant 980 : i32
    %15 = tpu.dynamic_rotate %1 by %c980_i32 dim 1 : vector<8x1024xf32>, i32 -> vector<8x1024xf32>
    %c964_i32 = arith.constant 964 : i32
    %16 = tpu.dynamic_rotate %1 by %c964_i32 dim 1 : vector<8x1024xf32>, i32 -> vector<8x1024xf32>
    %c963_i32 = arith.constant 963 : i32
    %17 = tpu.dynamic_rotate %1 by %c963_i32 dim 1 : vector<8x1024xf32>, i32 -> vector<8x1024xf32>
    %c962_i32 = arith.constant 962 : i32
    %18 = tpu.dynamic_rotate %1 by %c962_i32 dim 1 : vector<8x1024xf32>, i32 -> vector<8x1024xf32>
    %c961_i32 = arith.constant 961 : i32
    %19 = tpu.dynamic_rotate %1 by %c961_i32 dim 1 : vector<8x1024xf32>, i32 -> vector<8x1024xf32>
    %c960_i32 = arith.constant 960 : i32
    %20 = tpu.dynamic_rotate %1 by %c960_i32 dim 1 : vector<8x1024xf32>, i32 -> vector<8x1024xf32>
    %c944_i32 = arith.constant 944 : i32
    %21 = tpu.dynamic_rotate %1 by %c944_i32 dim 1 : vector<8x1024xf32>, i32 -> vector<8x1024xf32>
    %c943_i32 = arith.constant 943 : i32
    %22 = tpu.dynamic_rotate %1 by %c943_i32 dim 1 : vector<8x1024xf32>, i32 -> vector<8x1024xf32>
    %c942_i32 = arith.constant 942 : i32
    %23 = tpu.dynamic_rotate %1 by %c942_i32 dim 1 : vector<8x1024xf32>, i32 -> vector<8x1024xf32>
    %c941_i32 = arith.constant 941 : i32
    %24 = tpu.dynamic_rotate %1 by %c941_i32 dim 1 : vector<8x1024xf32>, i32 -> vector<8x1024xf32>
    %c940_i32 = arith.constant 940 : i32
    %25 = tpu.dynamic_rotate %1 by %c940_i32 dim 1 : vector<8x1024xf32>, i32 -> vector<8x1024xf32>
    %26 = tpu.concatenate %1, %2, %3, %4, %5, %6, %7, %8, %9, %10, %11, %12, %13, %14, %15, %16 in 0 : vector<8x1024xf32>, vector<8x1024xf32>, vector<8x1024xf32>, vector<8x1024xf32>, vector<8x1024xf32>, vector<8x1024xf32>, vector<8x1024xf32>, vector<8x1024xf32>, vector<8x1024xf32>, vector<8x1024xf32>, vector<8x1024xf32>, vector<8x1024xf32>, vector<8x1024xf32>, vector<8x1024xf32>, vector<8x1024xf32>, vector<8x1024xf32> -> vector<128x1024xf32>
    %27 = tpu.concatenate %17, %18, %19, %20, %21, %22, %23, %24, %25 in 0 : vector<8x1024xf32>, vector<8x1024xf32>, vector<8x1024xf32>, vector<8x1024xf32>, vector<8x1024xf32>, vector<8x1024xf32>, vector<8x1024xf32>, vector<8x1024xf32>, vector<8x1024xf32> -> vector<72x1024xf32>
    %28 = tpu.concatenate %26, %27 in 0 : vector<128x1024xf32>, vector<72x1024xf32> -> vector<200x1024xf32>
    %c0_2 = arith.constant 0 : index
    %c0_3 = arith.constant 0 : index
    %29 = vector.load %arg2[%c0_2, %c0_3] : memref<8x200xf32, #tpu.memory_space<vmem>>, vector<8x200xf32>
    %cst = arith.constant dense<0.000000e+00> : vector<8x1024xf32>
    %30 = tpu.matmul %29, %28, %cst {dimension_numbers = #tpu.dot_dimension_numbers<[1], [0], [0], [1], [0, 0, 1, 1], [], []>} : vector<8x200xf32>, vector<200x1024xf32>, vector<8x1024xf32> -> vector<8x1024xf32>
    %c0_4 = arith.constant 0 : index
    %c0_5 = arith.constant 0 : index
    %c0_6 = arith.constant 0 : index
    %31 = vector.load %arg3[%c0_4, %c0_5, %c0_6] : memref<1x8x1024xf32, #tpu.memory_space<vmem>>, vector<1x8x1024xf32>
    %32 = vector.shape_cast %31 : vector<1x8x1024xf32> to vector<8x1024xf32>
    %33 = vector.shape_cast %30 : vector<8x1024xf32> to vector<1x8x1024xf32>
    tpu.vector_store %arg3[%c0_4, %c0_5, %c0_6], %33 {strides = array<i32>} : memref<1x8x1024xf32, #tpu.memory_space<vmem>>, vector<1x8x1024xf32>,
    return
  }
  func.func @transform_0(%arg0: i32) -> (i32, i32, i32) {
    %c0_i32 = arith.constant 0 : i32
    %c0_i32_0 = arith.constant 0 : i32
    %c0_i32_1 = arith.constant 0 : i32
    return %arg0, %c0_i32, %c0_i32_0 : i32, i32, i32
  }
  func.func @transform_1(%arg0: i32) -> (i32, i32) {
    %c0_i32 = arith.constant 0 : i32
    %c0_i32_0 = arith.constant 0 : i32
    %c0_i32_1 = arith.constant 0 : i32
    return %c0_i32, %c0_i32_0 : i32, i32
  }
  func.func @transform_2(%arg0: i32) -> (i32, i32, i32) {
    %c0_i32 = arith.constant 0 : i32
    %c0_i32_0 = arith.constant 0 : i32
    %c0_i32_1 = arith.constant 0 : i32
    return %arg0, %c0_i32, %c0_i32_0 : i32, i32, i32
  }
}

</mosaic_0001>

<llo_original>
// kernel: tpu_custom_call.1
$region0: #{tpu_custom_call.1}
  #allocation0 [shape = 'u32[]', space=smem, size = 0x4, offset = 0x4, fixed_abs, tag = 'smem constant byte address 0x4 - core index']
  #allocation1 [shape = 'u32[144,128]{1,0:T(1,128)}', space=vmem, size = 0x12000, scoped, tag = 'internal scratch']
  %s0 = inlined_call_operand.hbm [shape: f32[1,8,1024], index: 0, kind: input, shape index: {}]
  %s1 = inlined_call_operand.hbm [shape: f32[8,200], index: 1, kind: input, shape index: {}]
  %s2 = inlined_call_operand.hbm [shape: f32[1,8,1024], index: 2, kind: output, shape index: {}]
  %s3 = sld [smem:[#allocation0]]
  $region26: #{tpu_custom_call.1} parent=0
    _
  %s5 = ssub.s32 1, %s3
  %s6 = scalar_select 0, %s5, %s3
  $region1: #{tpu_custom_call.1} parent=0
    #allocation2 [shape = 'u8[32768]{0}', space=vmem, size = 0x8000, scoped, tag = 'input window, operand 0, single buffered']
    #allocation3 [shape = 's32[1]{0}', space=sflag, size = 0x4, scoped, tag = 'scoped memory for tpu_custom_call.1']
    #allocation4 [shape = 's32[1]{0}', space=sflag, size = 0x4, scoped, tag = 'scoped memory for tpu_custom_call.1']
    #allocation5 [shape = 'u8[8192]{0}', space=vmem, size = 0x2000, scoped, tag = 'input window, operand 1, single buffered']
    #allocation6 [shape = 's32[1]{0}', space=sflag, size = 0x4, scoped, tag = 'scoped memory for tpu_custom_call.1']
    #allocation7 [shape = 'u8[32768]{0}', space=vmem, size = 0x8000, scoped, tag = 'output window, operand 0, single buffered']
    %7 = vsyncpa [#allocation3], 0
    %8 = vsyncpa [#allocation6], 0
    %9 = vsyncpa [#allocation4], 0
    // Predicated region
    $region2: #{tpu_custom_call.1} parent=1 // pred_check
      _
    $region3: #{tpu_custom_call.1} parent=1 // pred_check_branch
      %11 = sbr.rel (0) target = $region5
    $region4: #{tpu_custom_call.1} parent=1 // pred_region
      %s13 = ssub.s32 1024, 1024
      %14 = vsyncadd [#allocation3], %s13
      %s16 = sshll.u32 [#allocation2], 4
      %s17 = int_to_ptr.vmem [resolvable:$true] %s16
      %19 = dma.hbm_to_vmem [thread:$0]  %s0, 1024, %s17, [#allocation3]
    $region5: #{tpu_custom_call.1} parent=1 // pred_fallthru
      _
    // Predicated region
    $region6: #{tpu_custom_call.1} parent=1 // pred_check
      _
    $region7: #{tpu_custom_call.1} parent=1 // pred_check_branch
      %21 = sbr.rel (0) target = $region9
    $region8: #{tpu_custom_call.1} parent=1 // pred_region
      %s23 = ssub.s32 256, 256
      %24 = vsyncadd [#allocation6], %s23
      %s26 = sshll.u32 [#allocation5], 4
      %s27 = int_to_ptr.vmem [resolvable:$true] %s26
      %29 = dma.hbm_to_vmem [thread:$0]  %s1, 256, %s27, [#allocation6]
    $region9: #{tpu_custom_call.1} parent=1 // pred_fallthru
      _
    // Predicated region
    $region10: #{tpu_custom_call.1} parent=1 // pred_check
      _
    $region11: #{tpu_custom_call.1} parent=1 // pred_check_branch
      %31 = sbr.rel (0) target = $region13
    $region12: #{tpu_custom_call.1} parent=1 // pred_region
      %32 = dma.done [#allocation3], 1024
    $region13: #{tpu_custom_call.1} parent=1 // pred_fallthru
      _
    // Predicated region
    $region14: #{tpu_custom_call.1} parent=1 // pred_check
      _
    $region15: #{tpu_custom_call.1} parent=1 // pred_check_branch
      %34 = sbr.rel (0) target = $region17
    $region16: #{tpu_custom_call.1} parent=1 // pred_region
      %35 = dma.done [#allocation6], 256
    $region17: #{tpu_custom_call.1} parent=1 // pred_fallthru
      _
    %v36 = vld [vmem:[#allocation2] sm:$0xff]
    %v37 = vld [vmem:[#allocation2 + $0x8] sm:$0xff]
    %v38 = vld [vmem:[#allocation2 + $0x10] sm:$0xff]
    %v39 = vld [vmem:[#allocation2 + $0x18] sm:$0xff]
    %v40 = vld [vmem:[#allocation2 + $0x20] sm:$0xff]
    %v41 = vld [vmem:[#allocation2 + $0x28] sm:$0xff]
    %v42 = vld [vmem:[#allocation2 + $0x30] sm:$0xff]
    %v43 = vld [vmem:[#allocation2 + $0x38] sm:$0xff]
    %44 = vrot.lane.b32.xlu0 %v36, 127
    %v45 = vpop.permute.xlu0 %44
    %46 = vrot.lane.b32.xlu0 %v37, 127
    %v47 = vpop.permute.xlu0 %46
    %48 = vrot.lane.b32.xlu0 %v38, 127
    %v49 = vpop.permute.xlu0 %48
    %50 = vrot.lane.b32.xlu0 %v39, 127
    %v51 = vpop.permute.xlu0 %50
    %52 = vrot.lane.b32.xlu0 %v40, 127
    %v53 = vpop.permute.xlu0 %52
    %54 = vrot.lane.b32.xlu0 %v41, 127
    %v55 = vpop.permute.xlu0 %54
    %56 = vrot.lane.b32.xlu0 %v42, 127
    %v57 = vpop.permute.xlu0 %56
    %58 = vrot.lane.b32.xlu0 %v43, 127
    %v59 = vpop.permute.xlu0 %58
    %v60 = vlaneseq
    %v61 = vand.u32 %v60, 127
    %vm62 = vcmp.lt.s32.totalorder %v61, 127
    %v63 = vsel %vm62, %v57, %v59
    %v64 = vsel %vm62, %v55, %v57
    %v65 = vsel %vm62, %v53, %v55
    %v66 = vsel %vm62, %v51, %v53
    %v67 = vsel %vm62, %v49, %v51
    %v68 = vsel %vm62, %v47, %v49
    %v69 = vsel %vm62, %v45, %v47
    %v70 = vsel %vm62, %v59, %v45
    %71 = vrot.lane.b32.xlu0 %v36, 126
    %v72 = vpop.permute.xlu0 %71
    %73 = vrot.lane.b32.xlu0 %v37, 126
    %v74 = vpop.permute.xlu0 %73
    %75 = vrot.lane.b32.xlu0 %v38, 126
    %v76 = vpop.permute.xlu0 %75
    %77 = vrot.lane.b32.xlu0 %v39, 126
    %v78 = vpop.permute.xlu0 %77
    %79 = vrot.lane.b32.xlu0 %v40, 126
    %v80 = vpop.permute.xlu0 %79
    %81 = vrot.lane.b32.xlu0 %v41, 126
    %v82 = vpop.permute.xlu0 %81
    %83 = vrot.lane.b32.xlu0 %v42, 126
    %v84 = vpop.permute.xlu0 %83
    %85 = vrot.lane.b32.xlu0 %v43, 126
    %v86 = vpop.permute.xlu0 %85
    %vm87 = vcmp.lt.s32.totalorder %v61, 126
    %v88 = vsel %vm87, %v84, %v86
    %v89 = vsel %vm87, %v82, %v84
    %v90 = vsel %vm87, %v80, %v82
    %v91 = vsel %vm87, %v78, %v80
    %v92 = vsel %vm87, %v76, %v78
    %v93 = vsel %vm87, %v74, %v76
    %v94 = vsel %vm87, %v72, %v74
    %v95 = vsel %vm87, %v86, %v72
    %96 = vrot.lane.b32.xlu0 %v36, 125
    %v97 = vpop.permute.xlu0 %96
    %98 = vrot.lane.b32.xlu0 %v37, 125
    %v99 = vpop.permute.xlu0 %98
    %100 = vrot.lane.b32.xlu0 %v38, 125
    %v101 = vpop.permute.xlu0 %100
    %102 = vrot.lane.b32.xlu0 %v39, 125
    %v103 = vpop.permute.xlu0 %102
    %104 = vrot.lane.b32.xlu0 %v40, 125
    %v105 = vpop.permute.xlu0 %104
    %106 = vrot.lane.b32.xlu0 %v41, 125
    %v107 = vpop.permute.xlu0 %106
    %108 = vrot.lane.b32.xlu0 %v42, 125
    %v109 = vpop.permute.xlu0 %108
    %110 = vrot.lane.b32.xlu0 %v43, 125
    %v111 = vpop.permute.xlu0 %110
    %vm112 = vcmp.lt.s32.totalorder %v61, 125
    %v113 = vsel %vm112, %v109, %v111
    %v114 = vsel %vm112, %v107, %v109
    %v115 = vsel %vm112, %v105, %v107
    %v116 = vsel %vm112, %v103, %v105
    %v117 = vsel %vm112, %v101, %v103
    %v118 = vsel %vm112, %v99, %v101
    %v119 = vsel %vm112, %v97, %v99
    %v120 = vsel %vm112, %v111, %v97
    %121 = vrot.lane.b32.xlu0 %v36, 124
    %v122 = vpop.permute.xlu0 %121
    %123 = vrot.lane.b32.xlu0 %v37, 124
    %v124 = vpop.permute.xlu0 %123
    %125 = vrot.lane.b32.xlu0 %v38, 124
    %v126 = vpop.permute.xlu0 %125
    %127 = vrot.lane.b32.xlu0 %v39, 124
    %v128 = vpop.permute.xlu0 %127
    %129 = vrot.lane.b32.xlu0 %v40, 124
    %v130 = vpop.permute.xlu0 %129
    %131 = vrot.lane.b32.xlu0 %v41, 124
    %v132 = vpop.permute.xlu0 %131
    %133 = vrot.lane.b32.xlu0 %v42, 124
    %v134 = vpop.permute.xlu0 %133
    %135 = vrot.lane.b32.xlu0 %v43, 124
    %v136 = vpop.permute.xlu0 %135
    %vm137 = vcmp.lt.s32.totalorder %v61, 124
    %v138 = vsel %vm137, %v134, %v136
    %v139 = vsel %vm137, %v132, %v134
    %v140 = vsel %vm137, %v130, %v132
    %v141 = vsel %vm137, %v128, %v130
    %v142 = vsel %vm137, %v126, %v128
    %v143 = vsel %vm137, %v124, %v126
    %v144 = vsel %vm137, %v122, %v124
    %v145 = vsel %vm137, %v136, %v122
    %146 = vrot.lane.b32.xlu0 %v36, 108
    %v147 = vpop.permute.xlu0 %146
    %148 = vrot.lane.b32.xlu0 %v37, 108
    %v149 = vpop.permute.xlu0 %148
    %150 = vrot.lane.b32.xlu0 %v38, 108
    %v151 = vpop.permute.xlu0 %150
    %152 = vrot.lane.b32.xlu0 %v39, 108
    %v153 = vpop.permute.xlu0 %152
    %154 = vrot.lane.b32.xlu0 %v40, 108
    %v155 = vpop.permute.xlu0 %154
    %156 = vrot.lane.b32.xlu0 %v41, 108
    %v157 = vpop.permute.xlu0 %156
    %158 = vrot.lane.b32.xlu0 %v42, 108
    %v159 = vpop.permute.xlu0 %158
    %160 = vrot.lane.b32.xlu0 %v43, 108
    %v161 = vpop.permute.xlu0 %160
    %vm162 = vcmp.lt.s32.totalorder %v61, 108
    %v163 = vsel %vm162, %v159, %v161
    %v164 = vsel %vm162, %v157, %v159
    %v165 = vsel %vm162, %v155, %v157
    %v166 = vsel %vm162, %v153, %v155
    %v167 = vsel %vm162, %v151, %v153
    %v168 = vsel %vm162, %v149, %v151
    %v169 = vsel %vm162, %v147, %v149
    %v170 = vsel %vm162, %v161, %v147
    %171 = vrot.lane.b32.xlu0 %v36, 107
    %v172 = vpop.permute.xlu0 %171
    %173 = vrot.lane.b32.xlu0 %v37, 107
    %v174 = vpop.permute.xlu0 %173
    %175 = vrot.lane.b32.xlu0 %v38, 107
    %v176 = vpop.permute.xlu0 %175
    %177 = vrot.lane.b32.xlu0 %v39, 107
    %v178 = vpop.permute.xlu0 %177
    %179 = vrot.lane.b32.xlu0 %v40, 107
    %v180 = vpop.permute.xlu0 %179
    %181 = vrot.lane.b32.xlu0 %v41, 107
    %v182 = vpop.permute.xlu0 %181
    %183 = vrot.lane.b32.xlu0 %v42, 107
    %v184 = vpop.permute.xlu0 %183
    %185 = vrot.lane.b32.xlu0 %v43, 107
    %v186 = vpop.permute.xlu0 %185
    %vm187 = vcmp.lt.s32.totalorder %v61, 107
    %v188 = vsel %vm187, %v184, %v186
    %v189 = vsel %vm187, %v182, %v184
    %v190 = vsel %vm187, %v180, %v182
    %v191 = vsel %vm187, %v178, %v180
    %v192 = vsel %vm187, %v176, %v178
    %v193 = vsel %vm187, %v174, %v176
    %v194 = vsel %vm187, %v172, %v174
    %v195 = vsel %vm187, %v186, %v172
    %196 = vrot.lane.b32.xlu0 %v36, 106
    %v197 = vpop.permute.xlu0 %196
    %198 = vrot.lane.b32.xlu0 %v37, 106
    %v199 = vpop.permute.xlu0 %198
    %200 = vrot.lane.b32.xlu0 %v38, 106
    %v201 = vpop.permute.xlu0 %200
    %202 = vrot.lane.b32.xlu0 %v39, 106
    %v203 = vpop.permute.xlu0 %202
    %204 = vrot.lane.b32.xlu0 %v40, 106
    %v205 = vpop.permute.xlu0 %204
    %206 = vrot.lane.b32.xlu0 %v41, 106
    %v207 = vpop.permute.xlu0 %206
    %208 = vrot.lane.b32.xlu0 %v42, 106
    %v209 = vpop.permute.xlu0 %208
    %210 = vrot.lane.b32.xlu0 %v43, 106
    %v211 = vpop.permute.xlu0 %210
    %vm212 = vcmp.lt.s32.totalorder %v61, 106
    %v213 = vsel %vm212, %v209, %v211
    %v214 = vsel %vm212, %v207, %v209
    %v215 = vsel %vm212, %v205, %v207
    %v216 = vsel %vm212, %v203, %v205
    %v217 = vsel %vm212, %v201, %v203
    %v218 = vsel %vm212, %v199, %v201
    %v219 = vsel %vm212, %v197, %v199
    %v220 = vsel %vm212, %v211, %v197
    %221 = vrot.lane.b32.xlu0 %v36, 105
    %v222 = vpop.permute.xlu0 %221
    %223 = vrot.lane.b32.xlu0 %v37, 105
    %v224 = vpop.permute.xlu0 %223
    %225 = vrot.lane.b32.xlu0 %v38, 105
    %v226 = vpop.permute.xlu0 %225
    %227 = vrot.lane.b32.xlu0 %v39, 105
    %v228 = vpop.permute.xlu0 %227
    %229 = vrot.lane.b32.xlu0 %v40, 105
    %v230 = vpop.permute.xlu0 %229
    %231 = vrot.lane.b32.xlu0 %v41, 105
    %v232 = vpop.permute.xlu0 %231
    %233 = vrot.lane.b32.xlu0 %v42, 105
    %v234 = vpop.permute.xlu0 %233
    %235 = vrot.lane.b32.xlu0 %v43, 105
    %v236 = vpop.permute.xlu0 %235
    %vm237 = vcmp.lt.s32.totalorder %v61, 105
    %v238 = vsel %vm237, %v234, %v236
    %v239 = vsel %vm237, %v232, %v234
    %v240 = vsel %vm237, %v230, %v232
    %v241 = vsel %vm237, %v228, %v230
    %v242 = vsel %vm237, %v226, %v228
    %v243 = vsel %vm237, %v224, %v226
    %v244 = vsel %vm237, %v222, %v224
    %v245 = vsel %vm237, %v236, %v222
    %246 = vrot.lane.b32.xlu0 %v36, 104
    %v247 = vpop.permute.xlu0 %246
    %248 = vrot.lane.b32.xlu0 %v37, 104
    %v249 = vpop.permute.xlu0 %248
    %250 = vrot.lane.b32.xlu0 %v38, 104
    %v251 = vpop.permute.xlu0 %250
    %252 = vrot.lane.b32.xlu0 %v39, 104
    %v253 = vpop.permute.xlu0 %252
    %254 = vrot.lane.b32.xlu0 %v40, 104
    %v255 = vpop.permute.xlu0 %254
    %256 = vrot.lane.b32.xlu0 %v41, 104
    %v257 = vpop.permute.xlu0 %256
    %258 = vrot.lane.b32.xlu0 %v42, 104
    %v259 = vpop.permute.xlu0 %258
    %260 = vrot.lane.b32.xlu0 %v43, 104
    %v261 = vpop.permute.xlu0 %260
    %vm262 = vcmp.lt.s32.totalorder %v61, 104
    %v263 = vsel %vm262, %v259, %v261
    %v264 = vsel %vm262, %v257, %v259
    %v265 = vsel %vm262, %v255, %v257
    %v266 = vsel %vm262, %v253, %v255
    %v267 = vsel %vm262, %v251, %v253
    %v268 = vsel %vm262, %v249, %v251
    %v269 = vsel %vm262, %v247, %v249
    %v270 = vsel %vm262, %v261, %v247
    %271 = vrot.lane.b32.xlu0 %v36, 88
    %v272 = vpop.permute.xlu0 %271
    %273 = vrot.lane.b32.xlu0 %v37, 88
    %v274 = vpop.permute.xlu0 %273
    %275 = vrot.lane.b32.xlu0 %v38, 88
    %v276 = vpop.permute.xlu0 %275
    %277 = vrot.lane.b32.xlu0 %v39, 88
    %v278 = vpop.permute.xlu0 %277
    %279 = vrot.lane.b32.xlu0 %v40, 88
    %v280 = vpop.permute.xlu0 %279
    %281 = vrot.lane.b32.xlu0 %v41, 88
    %v282 = vpop.permute.xlu0 %281
    %283 = vrot.lane.b32.xlu0 %v42, 88
    %v284 = vpop.permute.xlu0 %283
    %285 = vrot.lane.b32.xlu0 %v43, 88
    %v286 = vpop.permute.xlu0 %285
    %vm287 = vcmp.lt.s32.totalorder %v61, 88
    %v288 = vsel %vm287, %v284, %v286
    %v289 = vsel %vm287, %v282, %v284
    %v290 = vsel %vm287, %v280, %v282
    %v291 = vsel %vm287, %v278, %v280
    %v292 = vsel %vm287, %v276, %v278
    %v293 = vsel %vm287, %v274, %v276
    %v294 = vsel %vm287, %v272, %v274
    %v295 = vsel %vm287, %v286, %v272
    %296 = vrot.lane.b32.xlu0 %v36, 87
    %v297 = vpop.permute.xlu0 %296
    %298 = vrot.lane.b32.xlu0 %v37, 87
    %v299 = vpop.permute.xlu0 %298
    %300 = vrot.lane.b32.xlu0 %v38, 87
    %v301 = vpop.permute.xlu0 %300
    %302 = vrot.lane.b32.xlu0 %v39, 87
    %v303 = vpop.permute.xlu0 %302
    %304 = vrot.lane.b32.xlu0 %v40, 87
    %v305 = vpop.permute.xlu0 %304
    %306 = vrot.lane.b32.xlu0 %v41, 87
    %v307 = vpop.permute.xlu0 %306
    %308 = vrot.lane.b32.xlu0 %v42, 87
    %v309 = vpop.permute.xlu0 %308
    %310 = vrot.lane.b32.xlu0 %v43, 87
    %v311 = vpop.permute.xlu0 %310
    %vm312 = vcmp.lt.s32.totalorder %v61, 87
    %v313 = vsel %vm312, %v309, %v311
    %v314 = vsel %vm312, %v307, %v309
    %v315 = vsel %vm312, %v305, %v307
    %v316 = vsel %vm312, %v303, %v305
    %v317 = vsel %vm312, %v301, %v303
    %v318 = vsel %vm312, %v299, %v301
    %v319 = vsel %vm312, %v297, %v299
    %v320 = vsel %vm312, %v311, %v297
    %321 = vrot.lane.b32.xlu0 %v36, 86
    %v322 = vpop.permute.xlu0 %321
    %323 = vrot.lane.b32.xlu0 %v37, 86
    %v324 = vpop.permute.xlu0 %323
    %325 = vrot.lane.b32.xlu0 %v38, 86
    %v326 = vpop.permute.xlu0 %325
    %327 = vrot.lane.b32.xlu0 %v39, 86
    %v328 = vpop.permute.xlu0 %327
    %329 = vrot.lane.b32.xlu0 %v40, 86
    %v330 = vpop.permute.xlu0 %329
    %331 = vrot.lane.b32.xlu0 %v41, 86
    %v332 = vpop.permute.xlu0 %331
    %333 = vrot.lane.b32.xlu0 %v42, 86
    %v334 = vpop.permute.xlu0 %333
    %335 = vrot.lane.b32.xlu0 %v43, 86
    %v336 = vpop.permute.xlu0 %335
    %vm337 = vcmp.lt.s32.totalorder %v61, 86
    %v338 = vsel %vm337, %v334, %v336
    %v339 = vsel %vm337, %v332, %v334
    %v340 = vsel %vm337, %v330, %v332
    %v341 = vsel %vm337, %v328, %v330
    %v342 = vsel %vm337, %v326, %v328
    %v343 = vsel %vm337, %v324, %v326
    %v344 = vsel %vm337, %v322, %v324
    %v345 = vsel %vm337, %v336, %v322
    %346 = vrot.lane.b32.xlu0 %v36, 85
    %v347 = vpop.permute.xlu0 %346
    %348 = vrot.lane.b32.xlu0 %v37, 85
    %v349 = vpop.permute.xlu0 %348
    %350 = vrot.lane.b32.xlu0 %v38, 85
    %v351 = vpop.permute.xlu0 %350
    %352 = vrot.lane.b32.xlu0 %v39, 85
    %v353 = vpop.permute.xlu0 %352
    %354 = vrot.lane.b32.xlu0 %v40, 85
    %v355 = vpop.permute.xlu0 %354
    %356 = vrot.lane.b32.xlu0 %v41, 85
    %v357 = vpop.permute.xlu0 %356
    %358 = vrot.lane.b32.xlu0 %v42, 85
    %v359 = vpop.permute.xlu0 %358
    %360 = vrot.lane.b32.xlu0 %v43, 85
    %v361 = vpop.permute.xlu0 %360
    %vm362 = vcmp.lt.s32.totalorder %v61, 85
    %v363 = vsel %vm362, %v359, %v361
    %v364 = vsel %vm362, %v357, %v359
    %v365 = vsel %vm362, %v355, %v357
    %v366 = vsel %vm362, %v353, %v355
    %v367 = vsel %vm362, %v351, %v353
    %v368 = vsel %vm362, %v349, %v351
    %v369 = vsel %vm362, %v347, %v349
    %v370 = vsel %vm362, %v361, %v347
    %371 = vrot.lane.b32.xlu0 %v36, 84
    %v372 = vpop.permute.xlu0 %371
    %373 = vrot.lane.b32.xlu0 %v37, 84
    %v374 = vpop.permute.xlu0 %373
    %375 = vrot.lane.b32.xlu0 %v38, 84
    %v376 = vpop.permute.xlu0 %375
    %377 = vrot.lane.b32.xlu0 %v39, 84
    %v378 = vpop.permute.xlu0 %377
    %379 = vrot.lane.b32.xlu0 %v40, 84
    %v380 = vpop.permute.xlu0 %379
    %381 = vrot.lane.b32.xlu0 %v41, 84
    %v382 = vpop.permute.xlu0 %381
    %383 = vrot.lane.b32.xlu0 %v42, 84
    %v384 = vpop.permute.xlu0 %383
    %385 = vrot.lane.b32.xlu0 %v43, 84
    %v386 = vpop.permute.xlu0 %385
    %vm387 = vcmp.lt.s32.totalorder %v61, 84
    %v388 = vsel %vm387, %v384, %v386
    %v389 = vsel %vm387, %v382, %v384
    %v390 = vsel %vm387, %v380, %v382
    %v391 = vsel %vm387, %v378, %v380
    %v392 = vsel %vm387, %v376, %v378
    %v393 = vsel %vm387, %v374, %v376
    %v394 = vsel %vm387, %v372, %v374
    %v395 = vsel %vm387, %v386, %v372
    %396 = vrot.lane.b32.xlu0 %v36, 68
    %v397 = vpop.permute.xlu0 %396
    %398 = vrot.lane.b32.xlu0 %v37, 68
    %v399 = vpop.permute.xlu0 %398
    %400 = vrot.lane.b32.xlu0 %v38, 68
    %v401 = vpop.permute.xlu0 %400
    %402 = vrot.lane.b32.xlu0 %v39, 68
    %v403 = vpop.permute.xlu0 %402
    %404 = vrot.lane.b32.xlu0 %v40, 68
    %v405 = vpop.permute.xlu0 %404
    %406 = vrot.lane.b32.xlu0 %v41, 68
    %v407 = vpop.permute.xlu0 %406
    %408 = vrot.lane.b32.xlu0 %v42, 68
    %v409 = vpop.permute.xlu0 %408
    %410 = vrot.lane.b32.xlu0 %v43, 68
    %v411 = vpop.permute.xlu0 %410
    %vm412 = vcmp.lt.s32.totalorder %v61, 68
    %v413 = vsel %vm412, %v409, %v411
    %v414 = vsel %vm412, %v407, %v409
    %v415 = vsel %vm412, %v405, %v407
    %v416 = vsel %vm412, %v403, %v405
    %v417 = vsel %vm412, %v401, %v403
    %v418 = vsel %vm412, %v399, %v401
    %v419 = vsel %vm412, %v397, %v399
    %v420 = vsel %vm412, %v411, %v397
    %421 = vrot.lane.b32.xlu0 %v36, 67
    %v422 = vpop.permute.xlu0 %421
    %423 = vrot.lane.b32.xlu0 %v37, 67
    %v424 = vpop.permute.xlu0 %423
    %425 = vrot.lane.b32.xlu0 %v38, 67
    %v426 = vpop.permute.xlu0 %425
    %427 = vrot.lane.b32.xlu0 %v39, 67
    %v428 = vpop.permute.xlu0 %427
    %429 = vrot.lane.b32.xlu0 %v40, 67
    %v430 = vpop.permute.xlu0 %429
    %431 = vrot.lane.b32.xlu0 %v41, 67
    %v432 = vpop.permute.xlu0 %431
    %433 = vrot.lane.b32.xlu0 %v42, 67
    %v434 = vpop.permute.xlu0 %433
    %435 = vrot.lane.b32.xlu0 %v43, 67
    %v436 = vpop.permute.xlu0 %435
    %vm437 = vcmp.lt.s32.totalorder %v61, 67
    %v438 = vsel %vm437, %v434, %v436
    %v439 = vsel %vm437, %v432, %v434
    %v440 = vsel %vm437, %v430, %v432
    %v441 = vsel %vm437, %v428, %v430
    %v442 = vsel %vm437, %v426, %v428
    %v443 = vsel %vm437, %v424, %v426
    %v444 = vsel %vm437, %v422, %v424
    %v445 = vsel %vm437, %v436, %v422
    %446 = vrot.lane.b32.xlu0 %v36, 66
    %v447 = vpop.permute.xlu0 %446
    %448 = vrot.lane.b32.xlu0 %v37, 66
    %v449 = vpop.permute.xlu0 %448
    %450 = vrot.lane.b32.xlu0 %v38, 66
    %v451 = vpop.permute.xlu0 %450
    %452 = vrot.lane.b32.xlu0 %v39, 66
    %v453 = vpop.permute.xlu0 %452
    %454 = vrot.lane.b32.xlu0 %v40, 66
    %v455 = vpop.permute.xlu0 %454
    %456 = vrot.lane.b32.xlu0 %v41, 66
    %v457 = vpop.permute.xlu0 %456
    %458 = vrot.lane.b32.xlu0 %v42, 66
    %v459 = vpop.permute.xlu0 %458
    %460 = vrot.lane.b32.xlu0 %v43, 66
    %v461 = vpop.permute.xlu0 %460
    %vm462 = vcmp.lt.s32.totalorder %v61, 66
    %v463 = vsel %vm462, %v459, %v461
    %v464 = vsel %vm462, %v457, %v459
    %v465 = vsel %vm462, %v455, %v457
    %v466 = vsel %vm462, %v453, %v455
    %v467 = vsel %vm462, %v451, %v453
    %v468 = vsel %vm462, %v449, %v451
    %v469 = vsel %vm462, %v447, %v449
    %v470 = vsel %vm462, %v461, %v447
    %471 = vrot.lane.b32.xlu0 %v36, 65
    %v472 = vpop.permute.xlu0 %471
    %473 = vrot.lane.b32.xlu0 %v37, 65
    %v474 = vpop.permute.xlu0 %473
    %475 = vrot.lane.b32.xlu0 %v38, 65
    %v476 = vpop.permute.xlu0 %475
    %477 = vrot.lane.b32.xlu0 %v39, 65
    %v478 = vpop.permute.xlu0 %477
    %479 = vrot.lane.b32.xlu0 %v40, 65
    %v480 = vpop.permute.xlu0 %479
    %481 = vrot.lane.b32.xlu0 %v41, 65
    %v482 = vpop.permute.xlu0 %481
    %483 = vrot.lane.b32.xlu0 %v42, 65
    %v484 = vpop.permute.xlu0 %483
    %485 = vrot.lane.b32.xlu0 %v43, 65
    %v486 = vpop.permute.xlu0 %485
    %vm487 = vcmp.lt.s32.totalorder %v61, 65
    %v488 = vsel %vm487, %v484, %v486
    %v489 = vsel %vm487, %v482, %v484
    %v490 = vsel %vm487, %v480, %v482
    %v491 = vsel %vm487, %v478, %v480
    %v492 = vsel %vm487, %v476, %v478
    %v493 = vsel %vm487, %v474, %v476
    %v494 = vsel %vm487, %v472, %v474
    %v495 = vsel %vm487, %v486, %v472
    %496 = vrot.lane.b32.xlu0 %v36, 64
    %v497 = vpop.permute.xlu0 %496
    %498 = vrot.lane.b32.xlu0 %v37, 64
    %v499 = vpop.permute.xlu0 %498
    %500 = vrot.lane.b32.xlu0 %v38, 64
    %v501 = vpop.permute.xlu0 %500
    %502 = vrot.lane.b32.xlu0 %v39, 64
    %v503 = vpop.permute.xlu0 %502
    %504 = vrot.lane.b32.xlu0 %v40, 64
    %v505 = vpop.permute.xlu0 %504
    %506 = vrot.lane.b32.xlu0 %v41, 64
    %v507 = vpop.permute.xlu0 %506
    %508 = vrot.lane.b32.xlu0 %v42, 64
    %v509 = vpop.permute.xlu0 %508
    %510 = vrot.lane.b32.xlu0 %v43, 64
    %v511 = vpop.permute.xlu0 %510
    %vm512 = vcmp.lt.s32.totalorder %v61, 64
    %v513 = vsel %vm512, %v509, %v511
    %v514 = vsel %vm512, %v507, %v509
    %v515 = vsel %vm512, %v505, %v507
    %v516 = vsel %vm512, %v503, %v505
    %v517 = vsel %vm512, %v501, %v503
    %v518 = vsel %vm512, %v499, %v501
    %v519 = vsel %vm512, %v497, %v499
    %v520 = vsel %vm512, %v511, %v497
    %521 = vrot.lane.b32.xlu0 %v36, 48
    %v522 = vpop.permute.xlu0 %521
    %523 = vrot.lane.b32.xlu0 %v37, 48
    %v524 = vpop.permute.xlu0 %523
    %525 = vrot.lane.b32.xlu0 %v38, 48
    %v526 = vpop.permute.xlu0 %525
    %527 = vrot.lane.b32.xlu0 %v39, 48
    %v528 = vpop.permute.xlu0 %527
    %529 = vrot.lane.b32.xlu0 %v40, 48
    %v530 = vpop.permute.xlu0 %529
    %531 = vrot.lane.b32.xlu0 %v41, 48
    %v532 = vpop.permute.xlu0 %531
    %533 = vrot.lane.b32.xlu0 %v42, 48
    %v534 = vpop.permute.xlu0 %533
    %535 = vrot.lane.b32.xlu0 %v43, 48
    %v536 = vpop.permute.xlu0 %535
    %vm537 = vcmp.lt.s32.totalorder %v61, 48
    %v538 = vsel %vm537, %v534, %v536
    %v539 = vsel %vm537, %v532, %v534
    %v540 = vsel %vm537, %v530, %v532
    %v541 = vsel %vm537, %v528, %v530
    %v542 = vsel %vm537, %v526, %v528
    %v543 = vsel %vm537, %v524, %v526
    %v544 = vsel %vm537, %v522, %v524
    %v545 = vsel %vm537, %v536, %v522
    %546 = vrot.lane.b32.xlu0 %v36, 47
    %v547 = vpop.permute.xlu0 %546
    %548 = vrot.lane.b32.xlu0 %v37, 47
    %v549 = vpop.permute.xlu0 %548
    %550 = vrot.lane.b32.xlu0 %v38, 47
    %v551 = vpop.permute.xlu0 %550
    %552 = vrot.lane.b32.xlu0 %v39, 47
    %v553 = vpop.permute.xlu0 %552
    %554 = vrot.lane.b32.xlu0 %v40, 47
    %v555 = vpop.permute.xlu0 %554
    %556 = vrot.lane.b32.xlu0 %v41, 47
    %v557 = vpop.permute.xlu0 %556
    %558 = vrot.lane.b32.xlu0 %v42, 47
    %v559 = vpop.permute.xlu0 %558
    %560 = vrot.lane.b32.xlu0 %v43, 47
    %v561 = vpop.permute.xlu0 %560
    %vm562 = vcmp.lt.s32.totalorder %v61, 47
    %v563 = vsel %vm562, %v559, %v561
    %v564 = vsel %vm562, %v557, %v559
    %v565 = vsel %vm562, %v555, %v557
    %v566 = vsel %vm562, %v553, %v555
    %v567 = vsel %vm562, %v551, %v553
    %v568 = vsel %vm562, %v549, %v551
    %v569 = vsel %vm562, %v547, %v549
    %v570 = vsel %vm562, %v561, %v547
    %571 = vrot.lane.b32.xlu0 %v36, 46
    %v572 = vpop.permute.xlu0 %571
    %573 = vrot.lane.b32.xlu0 %v37, 46
    %v574 = vpop.permute.xlu0 %573
    %575 = vrot.lane.b32.xlu0 %v38, 46
    %v576 = vpop.permute.xlu0 %575
    %577 = vrot.lane.b32.xlu0 %v39, 46
    %v578 = vpop.permute.xlu0 %577
    %579 = vrot.lane.b32.xlu0 %v40, 46
    %v580 = vpop.permute.xlu0 %579
    %581 = vrot.lane.b32.xlu0 %v41, 46
    %v582 = vpop.permute.xlu0 %581
    %583 = vrot.lane.b32.xlu0 %v42, 46
    %v584 = vpop.permute.xlu0 %583
    %585 = vrot.lane.b32.xlu0 %v43, 46
    %v586 = vpop.permute.xlu0 %585
    %vm587 = vcmp.lt.s32.totalorder %v61, 46
    %v588 = vsel %vm587, %v584, %v586
    %v589 = vsel %vm587, %v582, %v584
    %v590 = vsel %vm587, %v580, %v582
    %v591 = vsel %vm587, %v578, %v580
    %v592 = vsel %vm587, %v576, %v578
    %v593 = vsel %vm587, %v574, %v576
    %v594 = vsel %vm587, %v572, %v574
    %v595 = vsel %vm587, %v586, %v572
    %596 = vrot.lane.b32.xlu0 %v36, 45
    %v597 = vpop.permute.xlu0 %596
    %598 = vrot.lane.b32.xlu0 %v37, 45
    %v599 = vpop.permute.xlu0 %598
    %600 = vrot.lane.b32.xlu0 %v38, 45
    %v601 = vpop.permute.xlu0 %600
    %602 = vrot.lane.b32.xlu0 %v39, 45
    %v603 = vpop.permute.xlu0 %602
    %604 = vrot.lane.b32.xlu0 %v40, 45
    %v605 = vpop.permute.xlu0 %604
    %606 = vrot.lane.b32.xlu0 %v41, 45
    %v607 = vpop.permute.xlu0 %606
    %608 = vrot.lane.b32.xlu0 %v42, 45
    %v609 = vpop.permute.xlu0 %608
    %610 = vrot.lane.b32.xlu0 %v43, 45
    %v611 = vpop.permute.xlu0 %610
    %vm612 = vcmp.lt.s32.totalorder %v61, 45
    %v613 = vsel %vm612, %v609, %v611
    %v614 = vsel %vm612, %v607, %v609
    %v615 = vsel %vm612, %v605, %v607
    %v616 = vsel %vm612, %v603, %v605
    %v617 = vsel %vm612, %v601, %v603
    %v618 = vsel %vm612, %v599, %v601
    %v619 = vsel %vm612, %v597, %v599
    %v620 = vsel %vm612, %v611, %v597
    %621 = vrot.lane.b32.xlu0 %v36, 44
    %v622 = vpop.permute.xlu0 %621
    %623 = vrot.lane.b32.xlu0 %v37, 44
    %v624 = vpop.permute.xlu0 %623
    %625 = vrot.lane.b32.xlu0 %v38, 44
    %v626 = vpop.permute.xlu0 %625
    %627 = vrot.lane.b32.xlu0 %v39, 44
    %v628 = vpop.permute.xlu0 %627
    %629 = vrot.lane.b32.xlu0 %v40, 44
    %v630 = vpop.permute.xlu0 %629
    %631 = vrot.lane.b32.xlu0 %v41, 44
    %v632 = vpop.permute.xlu0 %631
    %633 = vrot.lane.b32.xlu0 %v42, 44
    %v634 = vpop.permute.xlu0 %633
    %635 = vrot.lane.b32.xlu0 %v43, 44
    %v636 = vpop.permute.xlu0 %635
    %vm637 = vcmp.lt.s32.totalorder %v61, 44
    %v638 = vsel %vm637, %v634, %v636
    %v639 = vsel %vm637, %v632, %v634
    %v640 = vsel %vm637, %v630, %v632
    %v641 = vsel %vm637, %v628, %v630
    %v642 = vsel %vm637, %v626, %v628
    %v643 = vsel %vm637, %v624, %v626
    %v644 = vsel %vm637, %v622, %v624
    %v645 = vsel %vm637, %v636, %v622
    %v646 = vld [vmem:[#allocation5] sm:$0xff]
    %v647 = vld [vmem:[#allocation5 + $0x8] sm:$0xff]
    %vm648 = vcmask 588800
    %v650 = vsel %vm648, %v647, 0
    %652 = vmatprep.subr.mxu0 %v37
    %653 = vmatpush1.msra.mxu0 %v36
    %654 = vmatprep.subr.mxu0 %v68
    %655 = vmatpush1.msra.mxu0 %v69
    %656 = vmatprep.subr.mxu0 %v93
    %657 = vmatpush1.msra.mxu0 %v94
    %658 = vmatprep.subr.mxu0 %v118
    %659 = vmatpush1.msra.mxu0 %v119
    %660 = vmatprep.subr.mxu0 %v143
    %661 = vmatpush1.msra.mxu0 %v144
    %662 = vmatprep.subr.mxu0 %v168
    %663 = vmatpush1.msra.mxu0 %v169
    %664 = vmatprep.subr.mxu0 %v193
    %665 = vmatpush1.msra.mxu0 %v194
    %666 = vmatprep.subr.mxu0 %v218
    %667 = vmatpush1.msra.mxu0 %v219
    %668 = vmatprep.subr.mxu0 %v243
    %669 = vmatpush1.msra.mxu0 %v244
    %670 = vmatprep.subr.mxu0 %v268
    %671 = vmatpush1.msra.mxu0 %v269
    %672 = vmatprep.subr.mxu0 %v293
    %673 = vmatpush1.msra.mxu0 %v294
    %674 = vmatprep.subr.mxu0 %v318
    %675 = vmatpush1.msra.mxu0 %v319
    %676 = vmatprep.subr.mxu0 %v343
    %677 = vmatpush1.msra.mxu0 %v344
    %678 = vmatprep.subr.mxu0 %v368
    %679 = vmatpush1.msra.mxu0 %v369
    %680 = vmatprep.subr.mxu0 %v393
    %681 = vmatpush1.msra.mxu0 %v394
    %682 = vmatprep.subr.mxu0 %v418
    %683 = vmatpush1.msra.mxu0 %v419
    %684 = vmatprep.subr.mxu0 %v443
    %685 = vmatpush1.msra.mxu0 %v444
    %686 = vmatprep.subr.mxu0 %v468
    %687 = vmatpush1.msra.mxu0 %v469
    %688 = vmatprep.subr.mxu0 %v493
    %689 = vmatpush1.msra.mxu0 %v494
    %690 = vmatprep.subr.mxu0 %v518
    %691 = vmatpush1.msra.mxu0 %v519
    %692 = vmatprep.subr.mxu0 %v543
    %693 = vmatpush1.msra.mxu0 %v544
    %694 = vmatprep.subr.mxu0 %v568
    %695 = vmatpush1.msra.mxu0 %v569
    %696 = vmatprep.subr.mxu0 %v593
    %697 = vmatpush1.msra.mxu0 %v594
    %698 = vmatprep.subr.mxu0 %v618
    %699 = vmatpush1.msra.mxu0 %v619
    %700 = vmatprep.subr.mxu0 %v643
    %701 = vmatpush1.msra.mxu0 %v644
    %702 = vmatprep.subr.mxu0 0.0
    %703 = vmatpush1.msra.mxu0 0.0
    %704 = vmatprep.subr.mxu0 0.0
    %705 = vmatpush1.msra.mxu0 0.0
    %706 = vmatprep.subr.mxu0 0.0
    %707 = vmatpush1.msra.mxu0 0.0
    %708 = vmatprep.subr.mxu0 0.0
    %709 = vmatpush1.msra.mxu0 0.0
    %710 = vmatprep.subr.mxu0 0.0
    %711 = vmatpush1.msra.mxu0 0.0
    %712 = vmatprep.subr.mxu0 0.0
    %713 = vmatpush1.msra.mxu0 0.0
    %714 = vmatprep.subr.mxu0 0.0
    %715 = vmatpush1.msra.mxu0 0.0
    %716 = vmatprep.mubr.f32.mxu0 %v650
    %717 = vmatmul.mubr.f32.gmra.mrb[0].mxu0 %v646
    %v718 = vpop.f32.mrb[0].mxu0
    %v719 = vadd.f32 0.0, %v718
    %v720 = vpop.f32.mrb[0].mxu0
    %v721 = vadd.f32 0.0, %v720
    %722 = vdwg.mxu0
    %723 = vmatprep.subr.mxu0 %v39
    %724 = vmatpush1.msra.mxu0 %v38
    %725 = vmatprep.subr.mxu0 %v66
    %726 = vmatpush1.msra.mxu0 %v67
    %727 = vmatprep.subr.mxu0 %v91
    %728 = vmatpush1.msra.mxu0 %v92
    %729 = vmatprep.subr.mxu0 %v116
    %730 = vmatpush1.msra.mxu0 %v117
    %731 = vmatprep.subr.mxu0 %v141
    %732 = vmatpush1.msra.mxu0 %v142
    %733 = vmatprep.subr.mxu0 %v166
    %734 = vmatpush1.msra.mxu0 %v167
    %735 = vmatprep.subr.mxu0 %v191
    %736 = vmatpush1.msra.mxu0 %v192
    %737 = vmatprep.subr.mxu0 %v216
    %738 = vmatpush1.msra.mxu0 %v217
    %739 = vmatprep.subr.mxu0 %v241
    %740 = vmatpush1.msra.mxu0 %v242
    %741 = vmatprep.subr.mxu0 %v266
    %742 = vmatpush1.msra.mxu0 %v267
    %743 = vmatprep.subr.mxu0 %v291
    %744 = vmatpush1.msra.mxu0 %v292
    %745 = vmatprep.subr.mxu0 %v316
    %746 = vmatpush1.msra.mxu0 %v317
    %747 = vmatprep.subr.mxu0 %v341
    %748 = vmatpush1.msra.mxu0 %v342
    %749 = vmatprep.subr.mxu0 %v366
    %750 = vmatpush1.msra.mxu0 %v367
    %751 = vmatprep.subr.mxu0 %v391
    %752 = vmatpush1.msra.mxu0 %v392
    %753 = vmatprep.subr.mxu0 %v416
    %754 = vmatpush1.msra.mxu0 %v417
    %755 = vmatprep.subr.mxu0 %v441
    %756 = vmatpush1.msra.mxu0 %v442
    %757 = vmatprep.subr.mxu0 %v466
    %758 = vmatpush1.msra.mxu0 %v467
    %759 = vmatprep.subr.mxu0 %v491
    %760 = vmatpush1.msra.mxu0 %v492
    %761 = vmatprep.subr.mxu0 %v516
    %762 = vmatpush1.msra.mxu0 %v517
    %763 = vmatprep.subr.mxu0 %v541
    %764 = vmatpush1.msra.mxu0 %v542
    %765 = vmatprep.subr.mxu0 %v566
    %766 = vmatpush1.msra.mxu0 %v567
    %767 = vmatprep.subr.mxu0 %v591
    %768 = vmatpush1.msra.mxu0 %v592
    %769 = vmatprep.subr.mxu0 %v616
    %770 = vmatpush1.msra.mxu0 %v617
    %771 = vmatprep.subr.mxu0 %v641
    %772 = vmatpush1.msra.mxu0 %v642
    %773 = vmatprep.subr.mxu0 0.0
    %774 = vmatpush1.msra.mxu0 0.0
    %775 = vmatprep.subr.mxu0 0.0
    %776 = vmatpush1.msra.mxu0 0.0
    %777 = vmatprep.subr.mxu0 0.0
    %778 = vmatpush1.msra.mxu0 0.0
    %779 = vmatprep.subr.mxu0 0.0
    %780 = vmatpush1.msra.mxu0 0.0
    %781 = vmatprep.subr.mxu0 0.0
    %782 = vmatpush1.msra.mxu0 0.0
    %783 = vmatprep.subr.mxu0 0.0
    %784 = vmatpush1.msra.mxu0 0.0
    %785 = vmatprep.subr.mxu0 0.0
    %786 = vmatpush1.msra.mxu0 0.0
    %787 = vmatprep.mubr.f32.mxu0 %v650
    %788 = vmatmul.mubr.f32.gmra.mrb[0].mxu0 %v646
    %v789 = vpop.f32.mrb[0].mxu0
    %v790 = vadd.f32 0.0, %v789
    %v791 = vpop.f32.mrb[0].mxu0
    %v792 = vadd.f32 0.0, %v791
    %793 = vdwg.mxu0
    %794 = vmatprep.subr.mxu0 %v41
    %795 = vmatpush1.msra.mxu0 %v40
    %796 = vmatprep.subr.mxu0 %v64
    %797 = vmatpush1.msra.mxu0 %v65
    %798 = vmatprep.subr.mxu0 %v89
    %799 = vmatpush1.msra.mxu0 %v90
    %800 = vmatprep.subr.mxu0 %v114
    %801 = vmatpush1.msra.mxu0 %v115
    %802 = vmatprep.subr.mxu0 %v139
    %803 = vmatpush1.msra.mxu0 %v140
    %804 = vmatprep.subr.mxu0 %v164
    %805 = vmatpush1.msra.mxu0 %v165
    %806 = vmatprep.subr.mxu0 %v189
    %807 = vmatpush1.msra.mxu0 %v190
    %808 = vmatprep.subr.mxu0 %v214
    %809 = vmatpush1.msra.mxu0 %v215
    %810 = vmatprep.subr.mxu0 %v239
    %811 = vmatpush1.msra.mxu0 %v240
    %812 = vmatprep.subr.mxu0 %v264
    %813 = vmatpush1.msra.mxu0 %v265
    %814 = vmatprep.subr.mxu0 %v289
    %815 = vmatpush1.msra.mxu0 %v290
    %816 = vmatprep.subr.mxu0 %v314
    %817 = vmatpush1.msra.mxu0 %v315
    %818 = vmatprep.subr.mxu0 %v339
    %819 = vmatpush1.msra.mxu0 %v340
    %820 = vmatprep.subr.mxu0 %v364
    %821 = vmatpush1.msra.mxu0 %v365
    %822 = vmatprep.subr.mxu0 %v389
    %823 = vmatpush1.msra.mxu0 %v390
    %824 = vmatprep.subr.mxu0 %v414
    %825 = vmatpush1.msra.mxu0 %v415
    %826 = vmatprep.subr.mxu0 %v439
    %827 = vmatpush1.msra.mxu0 %v440
    %828 = vmatprep.subr.mxu0 %v464
    %829 = vmatpush1.msra.mxu0 %v465
    %830 = vmatprep.subr.mxu0 %v489
    %831 = vmatpush1.msra.mxu0 %v490
    %832 = vmatprep.subr.mxu0 %v514
    %833 = vmatpush1.msra.mxu0 %v515
    %834 = vmatprep.subr.mxu0 %v539
    %835 = vmatpush1.msra.mxu0 %v540
    %836 = vmatprep.subr.mxu0 %v564
    %837 = vmatpush1.msra.mxu0 %v565
    %838 = vmatprep.subr.mxu0 %v589
    %839 = vmatpush1.msra.mxu0 %v590
    %840 = vmatprep.subr.mxu0 %v614
    %841 = vmatpush1.msra.mxu0 %v615
    %842 = vmatprep.subr.mxu0 %v639
    %843 = vmatpush1.msra.mxu0 %v640
    %844 = vmatprep.subr.mxu0 0.0
    %845 = vmatpush1.msra.mxu0 0.0
    %846 = vmatprep.subr.mxu0 0.0
    %847 = vmatpush1.msra.mxu0 0.0
    %848 = vmatprep.subr.mxu0 0.0
    %849 = vmatpush1.msra.mxu0 0.0
    %850 = vmatprep.subr.mxu0 0.0
    %851 = vmatpush1.msra.mxu0 0.0
    %852 = vmatprep.subr.mxu0 0.0
    %853 = vmatpush1.msra.mxu0 0.0
    %854 = vmatprep.subr.mxu0 0.0
    %855 = vmatpush1.msra.mxu0 0.0
    %856 = vmatprep.subr.mxu0 0.0
    %857 = vmatpush1.msra.mxu0 0.0
    %858 = vmatprep.mubr.f32.mxu0 %v650
    %859 = vmatmul.mubr.f32.gmra.mrb[0].mxu0 %v646
    %v860 = vpop.f32.mrb[0].mxu0
    %v861 = vadd.f32 0.0, %v860
    %v862 = vpop.f32.mrb[0].mxu0
    %v863 = vadd.f32 0.0, %v862
    %864 = vdwg.mxu0
    %865 = vmatprep.subr.mxu0 %v43
    %866 = vmatpush1.msra.mxu0 %v42
    %867 = vmatprep.subr.mxu0 %v70
    %868 = vmatpush1.msra.mxu0 %v63
    %869 = vmatprep.subr.mxu0 %v95
    %870 = vmatpush1.msra.mxu0 %v88
    %871 = vmatprep.subr.mxu0 %v120
    %872 = vmatpush1.msra.mxu0 %v113
    %873 = vmatprep.subr.mxu0 %v145
    %874 = vmatpush1.msra.mxu0 %v138
    %875 = vmatprep.subr.mxu0 %v170
    %876 = vmatpush1.msra.mxu0 %v163
    %877 = vmatprep.subr.mxu0 %v195
    %878 = vmatpush1.msra.mxu0 %v188
    %879 = vmatprep.subr.mxu0 %v220
    %880 = vmatpush1.msra.mxu0 %v213
    %881 = vmatprep.subr.mxu0 %v245
    %882 = vmatpush1.msra.mxu0 %v238
    %883 = vmatprep.subr.mxu0 %v270
    %884 = vmatpush1.msra.mxu0 %v263
    %885 = vmatprep.subr.mxu0 %v295
    %886 = vmatpush1.msra.mxu0 %v288
    %887 = vmatprep.subr.mxu0 %v320
    %888 = vmatpush1.msra.mxu0 %v313
    %889 = vmatprep.subr.mxu0 %v345
    %890 = vmatpush1.msra.mxu0 %v338
    %891 = vmatprep.subr.mxu0 %v370
    %892 = vmatpush1.msra.mxu0 %v363
    %893 = vmatprep.subr.mxu0 %v395
    %894 = vmatpush1.msra.mxu0 %v388
    %895 = vmatprep.subr.mxu0 %v420
    %896 = vmatpush1.msra.mxu0 %v413
    %897 = vmatprep.subr.mxu0 %v445
    %898 = vmatpush1.msra.mxu0 %v438
    %899 = vmatprep.subr.mxu0 %v470
    %900 = vmatpush1.msra.mxu0 %v463
    %901 = vmatprep.subr.mxu0 %v495
    %902 = vmatpush1.msra.mxu0 %v488
    %903 = vmatprep.subr.mxu0 %v520
    %904 = vmatpush1.msra.mxu0 %v513
    %905 = vmatprep.subr.mxu0 %v545
    %906 = vmatpush1.msra.mxu0 %v538
    %907 = vmatprep.subr.mxu0 %v570
    %908 = vmatpush1.msra.mxu0 %v563
    %909 = vmatprep.subr.mxu0 %v595
    %910 = vmatpush1.msra.mxu0 %v588
    %911 = vmatprep.subr.mxu0 %v620
    %912 = vmatpush1.msra.mxu0 %v613
    %913 = vmatprep.subr.mxu0 %v645
    %914 = vmatpush1.msra.mxu0 %v638
    %915 = vmatprep.subr.mxu0 0.0
    %916 = vmatpush1.msra.mxu0 0.0
    %917 = vmatprep.subr.mxu0 0.0
    %918 = vmatpush1.msra.mxu0 0.0
    %919 = vmatprep.subr.mxu0 0.0
    %920 = vmatpush1.msra.mxu0 0.0
    %921 = vmatprep.subr.mxu0 0.0
    %922 = vmatpush1.msra.mxu0 0.0
    %923 = vmatprep.subr.mxu0 0.0
    %924 = vmatpush1.msra.mxu0 0.0
    %925 = vmatprep.subr.mxu0 0.0
    %926 = vmatpush1.msra.mxu0 0.0
    %927 = vmatprep.subr.mxu0 0.0
    %928 = vmatpush1.msra.mxu0 0.0
    %929 = vmatprep.mubr.f32.mxu0 %v650
    %930 = vmatmul.mubr.f32.gmra.mrb[0].mxu0 %v646
    %v931 = vpop.f32.mrb[0].mxu0
    %v932 = vadd.f32 0.0, %v931
    %v933 = vpop.f32.mrb[0].mxu0
    %v934 = vadd.f32 0.0, %v933
    %935 = vdwg.mxu0
    %936 = vst [vmem:[#allocation7] sm:$0xff] %v719
    %937 = vst [vmem:[#allocation7 + $0x8] sm:$0xff] %v721
    %938 = vst [vmem:[#allocation7 + $0x10] sm:$0xff] %v790
    %939 = vst [vmem:[#allocation7 + $0x18] sm:$0xff] %v792
    %940 = vst [vmem:[#allocation7 + $0x20] sm:$0xff] %v861
    %941 = vst [vmem:[#allocation7 + $0x28] sm:$0xff] %v863
    %942 = vst [vmem:[#allocation7 + $0x30] sm:$0xff] %v932
    %943 = vst [vmem:[#allocation7 + $0x38] sm:$0xff] %v934
    // Predicated region
    $region18: #{tpu_custom_call.1} parent=1 // pred_check
      _
    $region19: #{tpu_custom_call.1} parent=1 // pred_check_branch
      %945 = sbr.rel (0) target = $region21
    $region20: #{tpu_custom_call.1} parent=1 // pred_region
      %s947 = ssub.s32 1024, 1024
      %948 = vsyncadd [#allocation4], %s947
      %s950 = sshll.u32 [#allocation7], 4
      %s951 = int_to_ptr.vmem [resolvable:$true] %s950
      %953 = dma.vmem_to_hbm [thread:$0]  %s951, 1024, %s2, [#allocation4]
    $region21: #{tpu_custom_call.1} parent=1 // pred_fallthru
      _
    // Predicated region
    $region22: #{tpu_custom_call.1} parent=1 // pred_check
      _
    $region23: #{tpu_custom_call.1} parent=1 // pred_check_branch
      %955 = sbr.rel (0) target = $region25
    $region24: #{tpu_custom_call.1} parent=1 // pred_region
      %956 = dma.done [#allocation4], 1024
    $region25: #{tpu_custom_call.1} parent=1 // pred_fallthru
      _
    %957 = vsyncpa [#allocation3], 1
    %958 = vsyncpa [#allocation6], 1
    %959 = vsyncpa [#allocation4], 1

</llo_original>
